<compile_context>
chip_gen: v5e
topology: v5e:2x2
jax: 0.10.0
libtpu: 0.0.40
codegen_flags: <defaults>
</compile_context>

<pallas_src>
import jax
import jax.numpy as jnp
from jax.experimental import pallas as pl
from jax.experimental.pallas import tpu as pltpu


def _round_up(x, mult):
    return ((x + mult - 1) // mult) * mult


def _svd_transform_kernel(x_ref, a_ref, b_ref, o_ref):
    # x_ref: (TM, IN) bf16, a_ref: (IN, Gp) bf16, b_ref: (Gp, OUT) bf16
    x = x_ref[...]
    a = a_ref[...]
    b = b_ref[...]
    # ALinear: x @ A_w   (native bf16 MXU matmul, fp32 accumulate)
    h = jnp.dot(x, a, preferred_element_type=jnp.float32)
    # BLinear: h @ B_w   (cast h to bf16 so the second matmul is also a native
    # bf16 MXU op and the intermediate stays small in vregs)
    y = jnp.dot(h.astype(jnp.bfloat16), b, preferred_element_type=jnp.float32)
    o_ref[...] = y.astype(o_ref.dtype)


def _vmem_limit_bytes():
    cap = None
    try:
        cap = getattr(pltpu.get_tpu_info(), "vmem_capacity_bytes", None)
    except Exception:
        cap = None
    if not cap:
        cap = 64 * 1024 * 1024  # conservative default (v7x per-TC VMEM)
    # Leave headroom; never request more than 96 MiB of scoped VMEM.
    return int(min((cap * 3) // 4, 96 * 1024 * 1024))


def _pick_tm(m, in_dim, out_dim, gamma_p, vmem_limit):
    """Largest M-tile whose double-buffered tiles + resident weights fit VMEM."""
    bpe = 2  # bf16
    weights_bytes = (in_dim * gamma_p + gamma_p * out_dim) * bpe
    budget = (vmem_limit * 3) // 4 - weights_bytes
    # Per-row cost: double-buffered x and out tiles (bf16) + fp32 intermediate h.
    per_row = 2 * (in_dim + out_dim) * bpe + gamma_p * 4
    tm_max = max(8, budget // max(per_row, 1))
    tm = 8
    for cand in (2048, 1024, 512, 256, 128, 64, 32, 16, 8):
        if cand <= tm_max:
            tm = cand
            break
    # Do not tile beyond what the (8-rounded) problem actually needs.
    return int(min(tm, _round_up(max(m, 1), 8)))


def svd_transform_forward(x, a_w, b_w):
    """x: (..., IN);  a_w: (IN, GAMMA);  b_w: (GAMMA, OUT).  Returns (..., OUT) bf16."""
    in_dim = x.shape[-1]
    gamma = a_w.shape[-1]
    out_dim = b_w.shape[-1]
    lead = x.shape[:-1]
    m = 1
    for d in lead:
        m *= d

    # bf16 inputs for the MXU; accumulation stays fp32 inside the kernel.
    x2d = x.reshape(m, in_dim).astype(jnp.bfloat16)
    a_w = a_w.astype(jnp.bfloat16)
    b_w = b_w.astype(jnp.bfloat16)

    # Lane-dense low-rank dim: zero-pad gamma to a multiple of 128 (removes
    # masked stores / tiny-K matmuls; padded lanes contribute exactly zero).
    gamma_p = _round_up(gamma, 128)
    if gamma_p != gamma:
        a_w = jnp.pad(a_w, ((0, 0), (0, gamma_p - gamma)))
        b_w = jnp.pad(b_w, ((0, gamma_p - gamma), (0, 0)))

    vmem_limit = _vmem_limit_bytes()
    tm = _pick_tm(m, in_dim, out_dim, gamma_p, vmem_limit)
    m_pad = _round_up(max(m, 1), tm)
    if m_pad != m:
        x2d = jnp.pad(x2d, ((0, m_pad - m), (0, 0)))
    grid = (m_pad // tm,)

    cost = pl.CostEstimate(
        flops=2 * m_pad * in_dim * gamma_p + 2 * m_pad * gamma_p * out_dim,
        transcendentals=0,
        bytes_accessed=2 * (m_pad * in_dim + m_pad * out_dim)
        + 2 * (in_dim * gamma_p + gamma_p * out_dim),
    )

    y2d = pl.pallas_call(
        _svd_transform_kernel,
        out_shape=jax.ShapeDtypeStruct((m_pad, out_dim), jnp.bfloat16),
        grid_spec=pltpu.PrefetchScalarGridSpec(
            num_scalar_prefetch=0,
            grid=grid,
            in_specs=[
                pl.BlockSpec((tm, in_dim), lambda i: (i, 0)),        # x streams
                pl.BlockSpec((in_dim, gamma_p), lambda i: (0, 0)),   # A resident
                pl.BlockSpec((gamma_p, out_dim), lambda i: (0, 0)),  # B resident
            ],
            out_specs=pl.BlockSpec((tm, out_dim), lambda i: (i, 0)),
        ),
        compiler_params=pltpu.CompilerParams(
            dimension_semantics=("parallel",),
            vmem_limit_bytes=vmem_limit,
        ),
        cost_estimate=cost,
    )(x2d, a_w, b_w)

    return y2d[:m].reshape(*lead, out_dim)


def build_svd_params(key, in_dim, out_dim, gamma):
    """Deterministically build the low-rank factors like SVDTransformLayer.__init__."""
    # Original dense weight, torch nn.Linear convention: (out, in)
    weight = jax.random.normal(key, (out_dim, in_dim), dtype=jnp.float32) * 0.05
    w_t = weight.T  # (in, out), fp32
    # Full SVD then truncate to rank gamma (stand-in for torch.svd_lowrank).
    u, s, vh = jnp.linalg.svd(w_t, full_matrices=False)
    u_g = u[:, :gamma]          # (in, gamma)
    s_g = s[:gamma]             # (gamma,)
    vh_g = vh[:gamma, :]        # (gamma, out)
    sqrt_s = jnp.sqrt(s_g)
    # torch casts factors to fp16; on TPU bf16 is the faithful-and-fast MXU dtype.
    a_w = (u_g * sqrt_s[None, :]).astype(jnp.bfloat16)     # (in, gamma)  = U @ sqrt(S)
    b_w = (sqrt_s[:, None] * vh_g).astype(jnp.bfloat16)    # (gamma, out) = sqrt(S) @ V.T
    # TODO(synk): the module's `bias is not None` branch assigns a bias of mismatched
    # shape onto ALinear (gamma vs out); only the bias=None path is implemented.
    return weight, a_w, b_w


if __name__ == "__main__":
    key = jax.random.PRNGKey(0)
    k_w, k_x = jax.random.split(key)

    batch, seq, in_dim, out_dim, gamma = 2, 8, 32, 32, 8

    weight, a_w, b_w = build_svd_params(k_w, in_dim, out_dim, gamma)
    x = jax.random.normal(k_x, (batch, seq, in_dim), dtype=jnp.float32).astype(jnp.bfloat16)

    y = svd_transform_forward(x, a_w, b_w)
    y = jax.block_until_ready(y)

    # Reference check in plain JAX (same bf16 factors, fp32 math, unpadded gamma).
    y_ref = (x.astype(jnp.float32) @ a_w.astype(jnp.float32)) @ b_w.astype(jnp.float32)
    assert y.shape == (batch, seq, out_dim)
    assert jnp.max(jnp.abs(y.astype(jnp.float32) - y_ref)) < 5e-2

    print("KERNEL_OK")
</pallas_src>

<mosaic_0001>
module attributes {stable_mosaic.version = 11 : i64} {
  func.func @_svd_transform_kernel(%arg0: i32, %arg1: memref<16x32xbf16, #tpu.memory_space<vmem>>, %arg2: memref<32x128xbf16, #tpu.memory_space<vmem>>, %arg3: memref<128x32xbf16, #tpu.memory_space<vmem>>, %arg4: memref<16x32xbf16, #tpu.memory_space<vmem>>) attributes {dimension_semantics = [#tpu.dimension_semantics<parallel>], iteration_bounds = array<i64: 1>, scalar_prefetch = 0 : i64, scratch_operands = 0 : i64, tpu.core_type = #tpu.core_type<tc>, window_params = [{transform_indices = @transform_0, window_bounds = array<i64: 16, 32>}, {pipeline_mode = #tpu.pipeline_mode<synchronous>, transform_indices = @transform_1, window_bounds = array<i64: 32, 128>}, {pipeline_mode = #tpu.pipeline_mode<synchronous>, transform_indices = @transform_2, window_bounds = array<i64: 128, 32>}, {transform_indices = @transform_3, window_bounds = array<i64: 16, 32>}]} {
    %c0 = arith.constant 0 : index
    %c0_0 = arith.constant 0 : index
    %0 = vector.load %arg1[%c0, %c0_0] : memref<16x32xbf16, #tpu.memory_space<vmem>>, vector<16x32xbf16>
    %c0_1 = arith.constant 0 : index
    %c0_2 = arith.constant 0 : index
    %1 = vector.load %arg2[%c0_1, %c0_2] : memref<32x128xbf16, #tpu.memory_space<vmem>>, vector<32x128xbf16>
    %c0_3 = arith.constant 0 : index
    %c0_4 = arith.constant 0 : index
    %2 = vector.load %arg3[%c0_3, %c0_4] : memref<128x32xbf16, #tpu.memory_space<vmem>>, vector<128x32xbf16>
    %cst = arith.constant dense<0.000000e+00> : vector<16x128xf32>
    %3 = tpu.matmul %0, %1, %cst {dimension_numbers = #tpu.dot_dimension_numbers<[1], [0], [0], [1], [0, 0, 1, 1], [], []>} : vector<16x32xbf16>, vector<32x128xbf16>, vector<16x128xf32> -> vector<16x128xf32>
    %4 = arith.truncf %3 : vector<16x128xf32> to vector<16x128xbf16>
    %cst_5 = arith.constant dense<0.000000e+00> : vector<16x32xf32>
    %5 = tpu.matmul %4, %2, %cst_5 {dimension_numbers = #tpu.dot_dimension_numbers<[1], [0], [0], [1], [0, 0, 1, 1], [], []>} : vector<16x128xbf16>, vector<128x32xbf16>, vector<16x32xf32> -> vector<16x32xf32>
    %6 = arith.truncf %5 : vector<16x32xf32> to vector<16x32xbf16>
    %c0_6 = arith.constant 0 : index
    %c0_7 = arith.constant 0 : index
    %7 = vector.load %arg4[%c0_6, %c0_7] : memref<16x32xbf16, #tpu.memory_space<vmem>>, vector<16x32xbf16>
    tpu.vector_store %arg4[%c0_6, %c0_7], %6 {strides = array<i32>} : memref<16x32xbf16, #tpu.memory_space<vmem>>, vector<16x32xbf16>,
    return
  }
  func.func @transform_0(%arg0: i32) -> (i32, i32) {
    %c0_i32 = arith.constant 0 : i32
    %c0_i32_0 = arith.constant 0 : i32
    return %arg0, %c0_i32 : i32, i32
  }
  func.func @transform_1(%arg0: i32) -> (i32, i32) {
    %c0_i32 = arith.constant 0 : i32
    %c0_i32_0 = arith.constant 0 : i32
    %c0_i32_1 = arith.constant 0 : i32
    return %c0_i32, %c0_i32_0 : i32, i32
  }
  func.func @transform_2(%arg0: i32) -> (i32, i32) {
    %c0_i32 = arith.constant 0 : i32
    %c0_i32_0 = arith.constant 0 : i32
    %c0_i32_1 = arith.constant 0 : i32
    return %c0_i32, %c0_i32_0 : i32, i32
  }
  func.func @transform_3(%arg0: i32) -> (i32, i32) {
    %c0_i32 = arith.constant 0 : i32
    %c0_i32_0 = arith.constant 0 : i32
    return %arg0, %c0_i32 : i32, i32
  }
}

</mosaic_0001>

<llo_original>
// kernel: tpu_custom_call.1
$region0: #{tpu_custom_call.1}
  #allocation0 [shape = 'u32[]', space=smem, size = 0x4, offset = 0x4, fixed_abs, tag = 'smem constant byte address 0x4 - core index']
  #allocation1 [shape = 'u32[72,128]{1,0:T(1,128)}', space=vmem, size = 0x9000, scoped, tag = 'internal scratch']
  %s0 = inlined_call_operand.vmem [shape: bf16[16,32], index: 0, kind: input, shape index: {}]
  %s1 = inlined_call_operand.vmem [shape: bf16[32,128], index: 1, kind: input, shape index: {}]
  %s2 = inlined_call_operand.vmem [shape: bf16[128,32], index: 2, kind: input, shape index: {}]
  %s3 = inlined_call_operand.hbm [shape: bf16[16,32], index: 3, kind: output, shape index: {}]
  %s4 = sld [smem:[#allocation0]]
  $region22: #{tpu_custom_call.1} parent=0
    _
  %s6 = ssub.s32 1, %s4
  %s7 = scalar_select 0, %s6, %s4
  $region1: #{tpu_custom_call.1} parent=0
    #allocation2 [shape = 'u8[4096]{0}', space=vmem, size = 0x1000, scoped, tag = 'output window, operand 0, single buffered']
    #allocation3 [shape = 's32[1]{0}', space=sflag, size = 0x4, scoped, tag = 'scoped memory for tpu_custom_call.1']
    %8 = vsyncpa [#allocation3], 0
    // Predicated region
    $region2: #{tpu_custom_call.1} parent=1 // pred_check
      _
    $region3: #{tpu_custom_call.1} parent=1 // pred_check_branch
      %10 = sbr.rel (0) target = $region5
    $region4: #{tpu_custom_call.1} parent=1 // pred_region
      _
    $region5: #{tpu_custom_call.1} parent=1 // pred_fallthru
      _
    // Predicated region
    $region6: #{tpu_custom_call.1} parent=1 // pred_check
      _
    $region7: #{tpu_custom_call.1} parent=1 // pred_check_branch
      %12 = sbr.rel (0) target = $region9
    $region8: #{tpu_custom_call.1} parent=1 // pred_region
      _
    $region9: #{tpu_custom_call.1} parent=1 // pred_fallthru
      _
    // Predicated region
    $region10: #{tpu_custom_call.1} parent=1 // pred_check
      _
    $region11: #{tpu_custom_call.1} parent=1 // pred_check_branch
      %14 = sbr.rel (0) target = $region13
    $region12: #{tpu_custom_call.1} parent=1 // pred_region
      _
    $region13: #{tpu_custom_call.1} parent=1 // pred_fallthru
      _
    %v16 = vld [vmem:[%s0] sm:$0xf]
    %v17 = vld [vmem:[%s0 + $0x4] sm:$0xf]
    %v18 = vld [vmem:[%s1] sm:$0xf]
    %v19 = vld [vmem:[%s1 + $0x4] sm:$0xf]
    %v20 = vld [vmem:[%s1 + $0x8] sm:$0xf]
    %v21 = vld [vmem:[%s1 + $0xc] sm:$0xf]
    %v22 = vld [vmem:[%s2] sm:$0xf]
    %v23 = vld [vmem:[%s2 + $0x4] sm:$0xf]
    %v24 = vld [vmem:[%s2 + $0x8] sm:$0xf]
    %v25 = vld [vmem:[%s2 + $0xc] sm:$0xf]
    %v26 = vld [vmem:[%s2 + $0x10] sm:$0xf]
    %v27 = vld [vmem:[%s2 + $0x14] sm:$0xf]
    %v28 = vld [vmem:[%s2 + $0x18] sm:$0xf]
    %v29 = vld [vmem:[%s2 + $0x1c] sm:$0xf]
    %v30 = vld [vmem:[%s2 + $0x20] sm:$0xf]
    %v31 = vld [vmem:[%s2 + $0x24] sm:$0xf]
    %v32 = vld [vmem:[%s2 + $0x28] sm:$0xf]
    %v33 = vld [vmem:[%s2 + $0x2c] sm:$0xf]
    %v34 = vld [vmem:[%s2 + $0x30] sm:$0xf]
    %v35 = vld [vmem:[%s2 + $0x34] sm:$0xf]
    %v36 = vld [vmem:[%s2 + $0x38] sm:$0xf]
    %v37 = vld [vmem:[%s2 + $0x3c] sm:$0xf]
    %v40 = vunpack.c.l.b16 %v16
    %v41 = vunpack.c.l.b16 %v17
    %v42 = vpack.c.b16 %v41, %v40
    %v47 = vunpack.c.l.b16 %v18
    %v48 = vunpack.c.l.b16 %v19
    %v49 = vunpack.c.l.b16 %v20
    %v50 = vunpack.c.l.b16 %v21
    %v51 = vpack.c.b16 %v48, %v47
    %v52 = vpack.c.b16 %v50, %v49
    %vm55 = vcmask 261120
    %v57 = vsel %vm55, %v42, 0
    %59 = vmatpush.bf16.msra.mxu0 0
    %60 = vmatpush.bf16.msra.mxu0 0
    %61 = vmatpush.bf16.msra.mxu0 0
    %62 = vmatpush.bf16.msra.mxu0 0
    %63 = vmatpush.bf16.msra.mxu0 0
    %64 = vmatpush.bf16.msra.mxu0 0
    %65 = vmatpush.bf16.msra.mxu0 %v52
    %66 = vmatpush.bf16.msra.mxu0 %v51
    %67 = vmatmul.bf16.gmra.mxu0 %v57
    %v68 = vpop.f32.mrf.mxu0
    %v69 = vadd.f32 0.0, %v68
    %v70 = vpop.f32.mrf.mxu0
    %v71 = vadd.f32 0.0, %v70
    %72 = vdwg.mxu0
    %v73 = vpack.c.bf16 %v71, %v69
    %v90 = vunpack.c.l.b16 %v22
    %v91 = vunpack.c.l.b16 %v23
    %v92 = vunpack.c.l.b16 %v24
    %v93 = vunpack.c.l.b16 %v25
    %v94 = vunpack.c.l.b16 %v26
    %v95 = vunpack.c.l.b16 %v27
    %v96 = vunpack.c.l.b16 %v28
    %v97 = vunpack.c.l.b16 %v29
    %v98 = vunpack.c.l.b16 %v30
    %v99 = vunpack.c.l.b16 %v31
    %v100 = vunpack.c.l.b16 %v32
    %v101 = vunpack.c.l.b16 %v33
    %v102 = vunpack.c.l.b16 %v34
    %v103 = vunpack.c.l.b16 %v35
    %v104 = vunpack.c.l.b16 %v36
    %v105 = vunpack.c.l.b16 %v37
    %v106 = vpack.c.b16 %v91, %v90
    %v107 = vpack.c.b16 %v93, %v92
    %v108 = vpack.c.b16 %v95, %v94
    %v109 = vpack.c.b16 %v97, %v96
    %v110 = vpack.c.b16 %v99, %v98
    %v111 = vpack.c.b16 %v101, %v100
    %v112 = vpack.c.b16 %v103, %v102
    %v113 = vpack.c.b16 %v105, %v104
    %122 = vmatpush.bf16.msra.mxu0 %v113
    %123 = vmatpush.bf16.msra.mxu0 %v112
    %124 = vmatpush.bf16.msra.mxu0 %v111
    %125 = vmatpush.bf16.msra.mxu0 %v110
    %126 = vmatpush.bf16.msra.mxu0 %v109
    %127 = vmatpush.bf16.msra.mxu0 %v108
    %128 = vmatpush.bf16.msra.mxu0 %v107
    %129 = vmatpush.bf16.msra.mxu0 %v106
    %130 = vmatmul.bf16.gmra.mxu0 %v73
    %v131 = vpop.f32.mrf.mxu0
    %v132 = vadd.f32 0.0, %v131
    %v133 = vpop.f32.mrf.mxu0
    %v134 = vadd.f32 0.0, %v133
    %135 = vdwg.mxu0
    %v136 = vpack.c.bf16 %v132, %v132
    %v137 = vpack.c.bf16 %v134, %v134
    %vm138 = vcmask 257024
    %139 = vst.msk [vmem:[#allocation2] sm:$0xf] %vm138, %v136
    %140 = vst.msk [vmem:[#allocation2 + $0x4] sm:$0xf] %vm138, %v137
    // Predicated region
    $region14: #{tpu_custom_call.1} parent=1 // pred_check
      _
    $region15: #{tpu_custom_call.1} parent=1 // pred_check_branch
      %142 = sbr.rel (0) target = $region17
    $region16: #{tpu_custom_call.1} parent=1 // pred_region
      %144 = vsyncadd [#allocation3], 0
      %s145 = sshll.u32 [#allocation2], 4
      %s146 = int_to_ptr.vmem [resolvable:$true] %s145
      %s147 = sshll.u32 %s3, 4
      %s148 = int_to_ptr.hbm [resolvable:$true] %s147
      %153 = dma.vmem_to_hbm [thread:$0]  %s146, 128, %s148, [#allocation3], 64, 64, 4
    $region17: #{tpu_custom_call.1} parent=1 // pred_fallthru
      _
    // Predicated region
    $region18: #{tpu_custom_call.1} parent=1 // pred_check
      _
    $region19: #{tpu_custom_call.1} parent=1 // pred_check_branch
      %155 = sbr.rel (0) target = $region21
    $region20: #{tpu_custom_call.1} parent=1 // pred_region
      %157 = dma.done [#allocation3], 128
    $region21: #{tpu_custom_call.1} parent=1 // pred_fallthru
      _
    %158 = vsyncpa [#allocation3], 1

</llo_original>
